<compile_context>
chip_gen: v7x
topology: tpu7x:2x2x1
jax: 0.10.0
libtpu: 0.0.40
codegen_flags: <defaults>
</compile_context>

<pallas_src>
import jax
import jax.numpy as jnp
from jax.experimental import pallas as pl
from jax.experimental.pallas import tpu as pltpu


def _x_debiasing_kernel(x_ref, s_ref, o_ref):
    # x_ref: (tm, tf) tile of feature; s_ref: (1, tf) scale slice; o_ref: (tm, tf)
    o_ref[...] = x_ref[...] * s_ref[...]


def _tpu_vmem_and_cores():
    """Best-effort hardware query; conservative fallbacks if unavailable."""
    try:
        info = pltpu.get_tpu_info()
        vmem = int(getattr(info, "vmem_capacity_bytes", 128 << 20))
    except Exception:
        vmem = 128 << 20
    # Heuristic: 64 MiB per-TC VMEM -> v7x-class chip with 2 TensorCores.
    num_tc = 2 if vmem <= (64 << 20) else 1
    return vmem, num_tc


def _maybe_fold_lanes(n: int, f: int):
    """If F < 128 and divides 128, fold rows into lanes: (N, F) -> (N*F/L, L)."""
    if f <= 0 or f >= 128 or 128 % f != 0:
        return None
    rows_per = 128 // f
    if n % rows_per != 0:
        return None
    # Grow the folded lane width while it still evenly divides N (cap 2048 lanes).
    while (rows_per * 2) <= n and n % (rows_per * 2) == 0 and (rows_per * 2 * f) <= 2048:
        rows_per *= 2
    return rows_per * f  # L, a multiple of 128


def _choose_tiles(n: int, f: int, itemsize: int, block_budget: int, num_tc: int):
    """Pick (tm, tf): lane-dense, sublane-aligned, ~block_budget bytes per block."""
    lane = 128
    sub = max(8, 32 // itemsize)  # f32: 8 rows, bf16: 16, int8: 32

    # Lane (F) tiling.
    if f % lane == 0:
        if sub * f * itemsize <= block_budget:
            tf = f  # keep full rows: largest contiguous DMA runs
        else:
            n_col = -(-(sub * f * itemsize) // block_budget)  # ceil
            tf = -(-f // n_col)
            tf = ((tf + lane - 1) // lane) * lane
            tf = min(tf, f)
    else:
        tf = f  # block dim == array dim is always legal

    # Row (N) tiling from the per-block VMEM budget.
    if n <= sub:
        tm = n  # full dim (legal even when not a multiple of 8)
    else:
        tm = block_budget // max(1, tf * itemsize)
        tm = max(sub, (tm // sub) * sub)
        n_pad = ((n + sub - 1) // sub) * sub
        tm = min(tm, n_pad)

        # Megacore split only on 2-TC chips and only if the TOTAL grid would be 1.
        if num_tc > 1 and pl.cdiv(n, tm) * pl.cdiv(f, tf) < 2:
            half = (n + 1) // 2
            tm = min(tm, max(sub, ((half + sub - 1) // sub) * sub))

    return tm, tf


def _vmem_limit(tm: int, tf: int, itemsize: int, vmem_cap: int) -> int:
    """Double-buffered in + out blocks + s tiles, +25% slack, clamped to physical."""
    need = 2 * 2 * tm * tf * itemsize      # feature in + out, double-buffered
    need += 2 * 1 * tf * itemsize          # s tile, double-buffered
    limit = int(need * 1.25) + (2 << 20)
    limit = max(limit, 8 << 20)
    return min(limit, vmem_cap)


def x_debiasing(feature: jax.Array, s: jax.Array) -> jax.Array:
    """Equivalent of torch.mm(feature, torch.diag(s)) = feature * s[None, :]."""
    n, f = feature.shape
    assert s.shape == (f,)

    itemsize = jnp.dtype(feature.dtype).itemsize
    sub = max(8, 32 // itemsize)
    vmem_cap, num_tc = _tpu_vmem_and_cores()
    block_budget = (8 << 20) if num_tc > 1 else (4 << 20)

    # Lane-fold small F so every store is a full, unmasked vst.
    fold_l = _maybe_fold_lanes(n, f)
    if fold_l is not None:
        x = feature.reshape(n * f // fold_l, fold_l)
        s_eff = jnp.tile(s, fold_l // f)
        n_eff, f_eff = x.shape
    else:
        x = feature
        s_eff = s
        n_eff, f_eff = n, f

    # Guard: very wide, non-128-aligned F would force an over-budget block.
    pad_f = 0
    if f_eff % 128 != 0 and sub * f_eff * itemsize > block_budget:
        pad_f = (-f_eff) % 128
        x = jnp.pad(x, ((0, 0), (0, pad_f)))
        s_eff = jnp.pad(s_eff, (0, pad_f))
        f_eff += pad_f

    tm, tf = _choose_tiles(n_eff, f_eff, itemsize, block_budget, num_tc)

    # Cast s once in the wrapper so the in-kernel multiply stays in feature.dtype.
    s2d = s_eff.astype(feature.dtype).reshape(1, f_eff)

    # Column axis first, row axis innermost: the s block index (0, j) is
    # constant across the inner sweep, so its tile is not re-fetched per step.
    grid = (pl.cdiv(f_eff, tf), pl.cdiv(n_eff, tm))

    out = pl.pallas_call(
        _x_debiasing_kernel,
        out_shape=jax.ShapeDtypeStruct((n_eff, f_eff), feature.dtype),
        grid=grid,
        in_specs=[
            pl.BlockSpec((tm, tf), lambda j, i: (i, j)),
            pl.BlockSpec((1, tf), lambda j, i: (0, j)),
        ],
        out_specs=pl.BlockSpec((tm, tf), lambda j, i: (i, j)),
        compiler_params=pltpu.CompilerParams(
            dimension_semantics=("parallel", "parallel"),
            vmem_limit_bytes=_vmem_limit(tm, tf, itemsize, vmem_cap),
        ),
    )(x, s2d)

    if fold_l is not None:
        out = out.reshape(n, f)
    elif pad_f:
        out = out[:, :f]
    return out


if __name__ == "__main__":
    key = jax.random.PRNGKey(0)

    # Small shapes consistent with the module (batch=8, in_features=32).
    # This exercises the lane-folding path: (8, 32) -> (1, 256) internally.
    n, in_features = 8, 32
    feature = jax.random.normal(key, (n, in_features), dtype=jnp.float32)
    # reset_parameters(): s.data.uniform_(1, 1) -> all ones (deterministic)
    s = jnp.ones((in_features,), dtype=jnp.float32)

    out = jax.block_until_ready(x_debiasing(feature, s))
    ref = feature @ jnp.diag(s)
    assert out.shape == (n, in_features)
    assert jnp.allclose(out, ref, atol=1e-6), "mismatch vs reference (small/folded)"

    # Secondary check exercising the non-folded, lane-aligned tiled path.
    k1, k2 = jax.random.split(key)
    n2, f2 = 256, 256
    feat2 = jax.random.normal(k1, (n2, f2), dtype=jnp.float32)
    s2 = jax.random.uniform(k2, (f2,), dtype=jnp.float32, minval=0.5, maxval=1.5)
    out2 = jax.block_until_ready(x_debiasing(feat2, s2))
    ref2 = feat2 * s2[None, :]
    assert jnp.allclose(out2, ref2, atol=1e-5), "mismatch vs reference (tiled)"

    # Third check: unaligned F (masked-lane fallback path), varied scale.
    k3, k4 = jax.random.split(k1)
    n3, f3 = 40, 100
    feat3 = jax.random.normal(k3, (n3, f3), dtype=jnp.float32)
    s3 = jax.random.uniform(k4, (f3,), dtype=jnp.float32, minval=0.5, maxval=1.5)
    out3 = jax.block_until_ready(x_debiasing(feat3, s3))
    ref3 = feat3 * s3[None, :]
    assert jnp.allclose(out3, ref3, atol=1e-5), "mismatch vs reference (unaligned)"

    print("KERNEL_OK")
</pallas_src>

<mosaic_0001>
module attributes {stable_mosaic.version = 11 : i64} {
  func.func @_x_debiasing_kernel(%arg0: i32, %arg1: i32, %arg2: memref<1x256xf32, #tpu.memory_space<vmem>>, %arg3: memref<1x256xf32, #tpu.memory_space<vmem>>, %arg4: memref<1x256xf32, #tpu.memory_space<vmem>>) attributes {dimension_semantics = [#tpu.dimension_semantics<parallel>, #tpu.dimension_semantics<parallel>], iteration_bounds = array<i64: 1, 1>, scalar_prefetch = 0 : i64, scratch_operands = 0 : i64, tpu.core_type = #tpu.core_type<tc>, window_params = [{transform_indices = @transform_0, window_bounds = array<i64: 1, 256>}, {transform_indices = @transform_1, window_bounds = array<i64: 1, 256>}, {transform_indices = @transform_2, window_bounds = array<i64: 1, 256>}]} {
    %c0 = arith.constant 0 : index
    %c0_0 = arith.constant 0 : index
    %0 = vector.load %arg2[%c0, %c0_0] : memref<1x256xf32, #tpu.memory_space<vmem>>, vector<1x256xf32>
    %c0_1 = arith.constant 0 : index
    %c0_2 = arith.constant 0 : index
    %1 = vector.load %arg3[%c0_1, %c0_2] : memref<1x256xf32, #tpu.memory_space<vmem>>, vector<1x256xf32>
    %2 = arith.mulf %0, %1 : vector<1x256xf32>
    %c0_3 = arith.constant 0 : index
    %c0_4 = arith.constant 0 : index
    %3 = vector.load %arg4[%c0_3, %c0_4] : memref<1x256xf32, #tpu.memory_space<vmem>>, vector<1x256xf32>
    tpu.vector_store %arg4[%c0_3, %c0_4], %2 {strides = array<i32>} : memref<1x256xf32, #tpu.memory_space<vmem>>, vector<1x256xf32>,
    return
  }
  func.func @transform_0(%arg0: i32, %arg1: i32) -> (i32, i32) {
    %c0_i32 = arith.constant 0 : i32
    return %arg1, %arg0 : i32, i32
  }
  func.func @transform_1(%arg0: i32, %arg1: i32) -> (i32, i32) {
    %c0_i32 = arith.constant 0 : i32
    %c0_i32_0 = arith.constant 0 : i32
    return %c0_i32, %arg0 : i32, i32
  }
  func.func @transform_2(%arg0: i32, %arg1: i32) -> (i32, i32) {
    %c0_i32 = arith.constant 0 : i32
    return %arg1, %arg0 : i32, i32
  }
}

</mosaic_0001>

<llo_original>
// kernel: tpu_custom_call.1
$region0: #{tpu_custom_call.1}
  #allocation0 [shape = 'u32[]', space=smem, size = 0x4, offset = 0x4, fixed_abs, tag = 'smem constant byte address 0x4 - core index']
  #allocation1 [shape = 'u32[144,128]{1,0:T(1,128)}', space=vmem, size = 0x12000, scoped, tag = 'internal scratch']
  %s0 = inlined_call_operand.hbm [shape: f32[1,256], index: 0, kind: input, shape index: {}]
  %s1 = inlined_call_operand.vmem [shape: f32[1,256], index: 1, kind: input, shape index: {}]
  %s2 = inlined_call_operand.hbm [shape: f32[1,256], index: 2, kind: output, shape index: {}]
  %s3 = sld [smem:[#allocation0]]
  $region22: #{tpu_custom_call.1} parent=0
    _
  %s5 = ssub.s32 1, %s3
  %s6 = scalar_select 0, %s5, %s3
  $region1: #{tpu_custom_call.1} parent=0
    #allocation2 [shape = 'u8[1024]{0}', space=vmem, size = 0x400, scoped, tag = 'input window, operand 0, single buffered']
    #allocation3 [shape = 's32[1]{0}', space=sflag, size = 0x4, scoped, tag = 'scoped memory for tpu_custom_call.1']
    #allocation4 [shape = 's32[1]{0}', space=sflag, size = 0x4, scoped, tag = 'scoped memory for tpu_custom_call.1']
    #allocation5 [shape = 'u8[1024]{0}', space=vmem, size = 0x400, scoped, tag = 'output window, operand 0, single buffered']
    %7 = vsyncpa [#allocation3], 0
    %8 = vsyncpa [#allocation4], 0
    // Predicated region
    $region2: #{tpu_custom_call.1} parent=1 // pred_check
      _
    $region3: #{tpu_custom_call.1} parent=1 // pred_check_branch
      %10 = sbr.rel (0) target = $region5
    $region4: #{tpu_custom_call.1} parent=1 // pred_region
      %s12 = ssub.s32 32, 32
      %13 = vsyncadd [#allocation3], %s12
      %s15 = sshll.u32 [#allocation2], 4
      %s16 = int_to_ptr.vmem [resolvable:$true] %s15
      %18 = dma.hbm_to_vmem [thread:$0]  %s0, 32, %s16, [#allocation3]
    $region5: #{tpu_custom_call.1} parent=1 // pred_fallthru
      _
    // Predicated region
    $region6: #{tpu_custom_call.1} parent=1 // pred_check
      _
    $region7: #{tpu_custom_call.1} parent=1 // pred_check_branch
      %20 = sbr.rel (0) target = $region9
    $region8: #{tpu_custom_call.1} parent=1 // pred_region
      _
    $region9: #{tpu_custom_call.1} parent=1 // pred_fallthru
      _
    // Predicated region
    $region10: #{tpu_custom_call.1} parent=1 // pred_check
      _
    $region11: #{tpu_custom_call.1} parent=1 // pred_check_branch
      %22 = sbr.rel (0) target = $region13
    $region12: #{tpu_custom_call.1} parent=1 // pred_region
      %23 = dma.done [#allocation3], 32
    $region13: #{tpu_custom_call.1} parent=1 // pred_fallthru
      _
    %v24 = vld [vmem:[#allocation2] sm:$0x3]
    %v25 = vld [vmem:[%s1] sm:$0x3]
    %v26 = vmul.f32 %v24, %v25
    %v27 = vlaneseq
    %vm28 = vcmp.ge.s32.totalorder %v27, 0
    %vm29 = vcmp.lt.s32.totalorder %v27, 256
    %vm30 = vmand %vm28, %vm29
    %31 = vst.msk [vmem:[#allocation5] sm:$0x3] %vm30, %v26
    // Predicated region
    $region14: #{tpu_custom_call.1} parent=1 // pred_check
      _
    $region15: #{tpu_custom_call.1} parent=1 // pred_check_branch
      %33 = sbr.rel (0) target = $region17
    $region16: #{tpu_custom_call.1} parent=1 // pred_region
      %s35 = ssub.s32 32, 32
      %36 = vsyncadd [#allocation4], %s35
      %s38 = sshll.u32 [#allocation5], 4
      %s39 = int_to_ptr.vmem [resolvable:$true] %s38
      %41 = dma.vmem_to_hbm [thread:$0]  %s39, 32, %s2, [#allocation4]
    $region17: #{tpu_custom_call.1} parent=1 // pred_fallthru
      _
    // Predicated region
    $region18: #{tpu_custom_call.1} parent=1 // pred_check
      _
    $region19: #{tpu_custom_call.1} parent=1 // pred_check_branch
      %43 = sbr.rel (0) target = $region21
    $region20: #{tpu_custom_call.1} parent=1 // pred_region
      %44 = dma.done [#allocation4], 32
    $region21: #{tpu_custom_call.1} parent=1 // pred_fallthru
      _
    %45 = vsyncpa [#allocation3], 1
    %46 = vsyncpa [#allocation4], 1

</llo_original>
